<compile_context>
chip_gen: v5e
topology: v5e:2x2
jax: 0.10.0
libtpu: 0.0.40
codegen_flags: <defaults>
</compile_context>

<pallas_src>
import math

import jax
import jax.numpy as jnp
import numpy as np
from jax.experimental import pallas as pl
from jax.experimental.pallas import tpu as pltpu

_LANES = 128
_SUBLANES = 8


def _cdiv(a, b):
    return -(-a // b)


def _round_up(x, m):
    return ((x + m - 1) // m) * m


def _default_num_cores():
    # v7x has 2 TensorCores per chip, each with its own HBM path; 1 elsewhere.
    try:
        kind = jax.devices()[0].device_kind.lower()
    except Exception:
        return 1
    return 2 if "v7" in kind else 1


def _choose_tile_rows(sizes, max_tile_rows):
    """Tile height in 128-lane rows (multiple of 8): as large as possible for HBM
    streaming while bounding the per-constraint zero padding (each constraint is
    padded to whole tiles so every tile has a single lambda scalar)."""
    c = max(len(sizes), 1)
    total_rows = sum(_cdiv(max(int(s), 1), _LANES) for s in sizes)
    tr = _round_up(max(total_rows // (4 * c), 1), _SUBLANES)
    return int(min(max(tr, _SUBLANES), _round_up(int(max_tile_rows), _SUBLANES)))


def _loss_kernel(tile_lam_sm, loss_ref, out_ref):
    """grid = (num_cores, tiles_per_core); axis 0 'parallel', axis 1 'arbitrary'.

    tile_lam_sm : (num_cores*tiles_per_core,) f32 in SMEM — min(lmbd, lmbd_p) of
                  the constraint owning each tile (0 for padding tiles).
    loss_ref    : (tile_rows, 128) f32 VMEM tile of the packed loss slab.
    out_ref     : (1, 8, 128) f32 resident per-core partial accumulator.
    """
    core = pl.program_id(0)
    t = pl.program_id(1)
    tiles_per_core = pl.num_programs(1)

    @pl.when(t == 0)
    def _init():
        out_ref[...] = jnp.zeros_like(out_ref)

    vals = loss_ref[...]                                            # (TR, 128)
    # where(x > 0, x, 0): NaN > 0 is False, negatives are False -> exactly
    # nansum(clamp(x, min=0)) once summed.  Single VPU predicate+select.
    contrib = jnp.where(vals > jnp.float32(0.0), vals, jnp.float32(0.0))
    groups = vals.shape[0] // _SUBLANES
    # Tile-aligned reshape + sublane fold: pure VPU vreg adds, no lane reduce.
    folded = contrib.reshape(groups, _SUBLANES, _LANES).sum(axis=0)  # (8, 128)

    lam = tile_lam_sm[core * tiles_per_core + t]                    # SMEM scalar
    out_ref[...] += (lam * folded).reshape(1, _SUBLANES, _LANES)


def pack_constraint_losses(loss_tensors, lam, *, num_cores, max_tile_rows=8192):
    """Pack per-constraint loss tensors into a lane-dense (rows, 128) f32 slab
    plus a per-tile lambda vector (kept in SMEM by the kernel).

    TODO(synk): in the real DomiKnowS pipeline the per-constraint lcLoss
    producers should write directly into a persistent, preallocated slab
    (buffer donation / input_output_aliases) so this packing pass — an extra
    HBM read+write of every loss element, retraced per shape set — disappears.
    """
    C = len(loss_tensors)
    tile_rows = _choose_tile_rows(
        [int(np.prod(t.shape)) for t in loss_tensors], max_tile_rows)
    tile_elems = tile_rows * _LANES

    pieces, tiles_per_constraint = [], []
    for t in loss_tensors:
        flat = jnp.asarray(t, jnp.float32).reshape(-1)
        n_tiles = max(_cdiv(max(flat.size, 1), tile_elems), 1)
        pad = n_tiles * tile_elems - flat.size
        if pad > 0:
            flat = jnp.concatenate([flat, jnp.zeros((pad,), jnp.float32)])
        pieces.append(flat)
        tiles_per_constraint.append(n_tiles)

    total_tiles = int(sum(tiles_per_constraint))
    tiles_per_core = _cdiv(total_tiles, num_cores)
    padded_tiles = tiles_per_core * num_cores
    if padded_tiles > total_tiles:
        pieces.append(jnp.zeros(((padded_tiles - total_tiles) * tile_elems,),
                                jnp.float32))
    slab = jnp.concatenate(pieces).reshape(padded_tiles * tile_rows, _LANES)

    owner = np.repeat(np.arange(C), tiles_per_constraint)          # static ints
    tile_lam = jnp.asarray(lam, jnp.float32)[owner]                # (total_tiles,)
    if padded_tiles > total_tiles:
        tile_lam = jnp.concatenate(
            [tile_lam, jnp.zeros((padded_tiles - total_tiles,), jnp.float32)])
    return slab, tile_lam, tile_rows, tiles_per_core


def packed_loss_forward(slab, tile_lam, *, tile_rows, tiles_per_core, num_cores):
    tpc = tiles_per_core
    partials = pl.pallas_call(
        _loss_kernel,
        out_shape=jax.ShapeDtypeStruct((num_cores, _SUBLANES, _LANES),
                                       jnp.float32),
        grid=(num_cores, tpc),
        in_specs=[
            pl.BlockSpec(memory_space=pltpu.MemorySpace.SMEM),      # per-tile lam
            pl.BlockSpec((tile_rows, _LANES),
                         lambda k, t: (k * tpc + t, 0)),            # loss slab
        ],
        out_specs=pl.BlockSpec((1, _SUBLANES, _LANES),
                               lambda k, t: (k, 0, 0)),
        compiler_params=pltpu.CompilerParams(
            dimension_semantics=("parallel", "arbitrary")),
    )(tile_lam, slab)
    # Tiny final reduction (num_cores * 1024 elements) in the wrapper.
    return jnp.sum(partials)


def loss_model_forward(loss_tensors, lmbd, lmbd_p, *, max_tile_rows=8192,
                       num_cores=None):
    """lmbd_loss = sum_i min(lmbd[i], lmbd_p[i]) * nansum(clamp(loss_i, min=0))."""
    C = len(loss_tensors)
    if C == 0:
        return jnp.float32(0.0)
    lmbd = jnp.asarray(lmbd, jnp.float32)
    lmbd_p = jnp.asarray(lmbd_p, jnp.float32)
    assert lmbd.shape[0] == C and lmbd_p.shape[0] == C
    if num_cores is None:
        num_cores = _default_num_cores()

    # get_lmbd(key) == lmbd[i].clamp(max=lmbd_p[i]) == min(lmbd[i], lmbd_p[i])
    lam = jnp.minimum(lmbd, lmbd_p)
    slab, tile_lam, tile_rows, tiles_per_core = pack_constraint_losses(
        loss_tensors, lam, num_cores=num_cores, max_tile_rows=max_tile_rows)
    return packed_loss_forward(slab, tile_lam, tile_rows=tile_rows,
                               tiles_per_core=tiles_per_core,
                               num_cores=num_cores)


def _reference(loss_tensors, lmbd, lmbd_p):
    total = jnp.float32(0.0)
    for i, t in enumerate(loss_tensors):
        clamped = jnp.maximum(jnp.asarray(t, jnp.float32), 0.0)  # NaN stays NaN
        nansum = jnp.nansum(clamped)
        lam = jnp.minimum(lmbd[i], lmbd_p[i])
        total = total + lam * nansum
    return total


if __name__ == "__main__":
    key = jax.random.PRNGKey(0)

    # Synthetic "graph": 4 logical constraints with p values (percent).
    constraint_p = [90.0, 95.0, 80.0, 100.0]
    C = len(constraint_p)

    # Parameter init exactly as in LossModel.__init__ / reset_parameters:
    lmbd = jnp.ones((C,), jnp.float32)                  # constant_(lmbd, 1.0)
    lmbd_p_list = []
    for p_raw in constraint_p:
        p = p_raw / 100.0
        if p == 1.0:
            p = 0.999999999999999
        lmbd_p_list.append(-math.log(1.0 - p))
    lmbd_p = jnp.asarray(lmbd_p_list, jnp.float32)

    # Per-constraint loss tensors produced by calculateLcLoss (synthetic here),
    # with negatives and NaNs to exercise clamp(min=0) + nansum.
    lengths = [50, 120, 200, 33]
    loss_tensors = []
    for n in lengths:
        key, k1, k2 = jax.random.split(key, 3)
        vals = jax.random.normal(k1, (n,), jnp.float32)
        nan_mask = jax.random.bernoulli(k2, 0.1, (n,))
        vals = jnp.where(nan_mask, jnp.nan, vals)
        loss_tensors.append(vals)

    out = loss_model_forward(loss_tensors, lmbd, lmbd_p)
    out = jax.block_until_ready(out)

    ref = _reference(loss_tensors, lmbd, lmbd_p)
    np.testing.assert_allclose(np.asarray(out), np.asarray(ref),
                               rtol=1e-5, atol=1e-5)
    print("KERNEL_OK")
</pallas_src>

<mosaic_0001>
module attributes {stable_mosaic.version = 11 : i64} {
  func.func @_loss_kernel(%arg0: i32, %arg1: i32, %arg2: memref<4xf32, #tpu.memory_space<smem>>, %arg3: memref<8x128xf32, #tpu.memory_space<vmem>>, %arg4: memref<1x8x128xf32, #tpu.memory_space<vmem>>) attributes {dimension_semantics = [#tpu.dimension_semantics<parallel>, #tpu.dimension_semantics<arbitrary>], iteration_bounds = array<i64: 1, 4>, scalar_prefetch = 0 : i64, scratch_operands = 0 : i64, tpu.core_type = #tpu.core_type<tc>, window_params = [{transform_indices = @transform_0, window_bounds = array<i64: 4>}, {transform_indices = @transform_1, window_bounds = array<i64: 8, 128>}, {transform_indices = @transform_2, window_bounds = array<i64: 1, 8, 128>}]} {
    %c0_i32 = arith.constant 0 : i32
    %0 = arith.cmpi eq, %arg1, %c0_i32 : i32
    %1 = arith.extui %0 : i1 to i32
    %c0_i32_0 = arith.constant 0 : i32
    %2 = arith.cmpi ne, %1, %c0_i32_0 : i32
    scf.if %2 {
      %cst_10 = arith.constant 0.000000e+00 : f32
      %20 = vector.broadcast %cst_10 : f32 to vector<1x8x128xf32>
      %c0_11 = arith.constant 0 : index
      %c0_12 = arith.constant 0 : index
      %c0_13 = arith.constant 0 : index
      %21 = vector.load %arg4[%c0_11, %c0_12, %c0_13] : memref<1x8x128xf32, #tpu.memory_space<vmem>>, vector<1x8x128xf32>
      tpu.vector_store %arg4[%c0_11, %c0_12, %c0_13], %20 {strides = array<i32>} : memref<1x8x128xf32, #tpu.memory_space<vmem>>, vector<1x8x128xf32>,
    } else {
    }
    %c0 = arith.constant 0 : index
    %c0_1 = arith.constant 0 : index
    %3 = vector.load %arg3[%c0, %c0_1] : memref<8x128xf32, #tpu.memory_space<vmem>>, vector<8x128xf32>
    %cst = arith.constant 0.000000e+00 : f32
    %4 = vector.broadcast %cst : f32 to vector<8x128xf32>
    %5 = arith.cmpf ogt, %3, %4 : vector<8x128xf32>
    %cst_2 = arith.constant 0.000000e+00 : f32
    %6 = vector.broadcast %cst_2 : f32 to vector<8x128xf32>
    %7 = arith.select %5, %3, %6 : vector<8x128xi1>, vector<8x128xf32>
    %8 = vector.shape_cast %7 : vector<8x128xf32> to vector<1x8x128xf32>
    %cst_3 = arith.constant dense<0.000000e+00> : vector<8x128xf32>
    %9 = vector.multi_reduction <add>, %8, %cst_3 [0] : vector<1x8x128xf32> to vector<8x128xf32>
    %c4_i32 = arith.constant 4 : i32
    %10 = arith.muli %arg0, %c4_i32 : i32
    %11 = arith.addi %10, %arg1 : i32
    %12 = arith.index_cast %11 : i32 to index
    %13 = memref.load %arg2[%12] : memref<4xf32, #tpu.memory_space<smem>>
    %c0_4 = arith.constant 0 : index
    %c0_5 = arith.constant 0 : index
    %c0_6 = arith.constant 0 : index
    %14 = vector.load %arg4[%c0_4, %c0_5, %c0_6] : memref<1x8x128xf32, #tpu.memory_space<vmem>>, vector<1x8x128xf32>
    %15 = vector.broadcast %13 : f32 to vector<8x128xf32>
    %16 = arith.mulf %15, %9 : vector<8x128xf32>
    %17 = vector.shape_cast %16 : vector<8x128xf32> to vector<1x8x128xf32>
    %18 = arith.addf %14, %17 : vector<1x8x128xf32>
    %c0_7 = arith.constant 0 : index
    %c0_8 = arith.constant 0 : index
    %c0_9 = arith.constant 0 : index
    %19 = vector.load %arg4[%c0_7, %c0_8, %c0_9] : memref<1x8x128xf32, #tpu.memory_space<vmem>>, vector<1x8x128xf32>
    tpu.vector_store %arg4[%c0_7, %c0_8, %c0_9], %18 {strides = array<i32>} : memref<1x8x128xf32, #tpu.memory_space<vmem>>, vector<1x8x128xf32>,
    return
  }
  func.func @transform_0(%arg0: i32, %arg1: i32) -> i32 {
    %c0_i32 = arith.constant 0 : i32
    %c0_i32_0 = arith.constant 0 : i32
    return %c0_i32 : i32
  }
  func.func @transform_1(%arg0: i32, %arg1: i32) -> (i32, i32) {
    %c4_i32 = arith.constant 4 : i32
    %0 = arith.muli %arg0, %c4_i32 : i32
    %1 = arith.addi %0, %arg1 : i32
    %c0_i32 = arith.constant 0 : i32
    %c0_i32_0 = arith.constant 0 : i32
    return %1, %c0_i32 : i32, i32
  }
  func.func @transform_2(%arg0: i32, %arg1: i32) -> (i32, i32, i32) {
    %c0_i32 = arith.constant 0 : i32
    %c0_i32_0 = arith.constant 0 : i32
    %c0_i32_1 = arith.constant 0 : i32
    return %arg0, %c0_i32, %c0_i32_0 : i32, i32, i32
  }
}

</mosaic_0001>

<llo_original>
// kernel: tpu_custom_call.1
$region0: #{tpu_custom_call.1}
  #allocation0 [shape = 'u32[]', space=smem, size = 0x4, offset = 0x4, fixed_abs, tag = 'smem constant byte address 0x4 - core index']
  #allocation1 [shape = 'u32[72,128]{1,0:T(1,128)}', space=vmem, size = 0x9000, scoped, tag = 'internal scratch']
  %s0 = inlined_call_operand.hbm [shape: f32[4], index: 0, kind: input, shape index: {}]
  %s1 = inlined_call_operand.hbm [shape: f32[32,128], index: 1, kind: input, shape index: {}]
  %s2 = inlined_call_operand.hbm [shape: f32[1,8,128], index: 2, kind: output, shape index: {}]
  %s3 = sld [smem:[#allocation0]]
  $region53: #{tpu_custom_call.1} parent=0
    _
  %s5 = ssub.s32 1, %s3
  %s6 = scalar_select 0, %s5, %s3
  $region1: #{tpu_custom_call.1} parent=0
    #allocation2 [shape = 'u8[512]{0}', space=smem, size = 0x200, scoped, tag = 'input window, operand 0, single buffered']
    #allocation3 [shape = 's32[2]{0}', space=sflag, size = 0x8, scoped, tag = 'scoped memory for tpu_custom_call.1']
    #allocation4 [shape = 's32[2]{0}', space=sflag, size = 0x8, scoped, tag = 'scoped memory for tpu_custom_call.1']
    #allocation5 [shape = 's32[2]{0}', space=sflag, size = 0x8, scoped, tag = 'scoped memory for tpu_custom_call.1']
    #allocation6 [shape = 'u8[8192]{0}', space=vmem, size = 0x2000, scoped, tag = 'input window, operand 1']
    #allocation7 [shape = 'u8[4096]{0}', space=vmem, size = 0x1000, scoped, tag = 'output window, operand 0, single buffered']
    %7 = vsyncpa [#allocation5], 0
    %8 = vsyncpa [#allocation3], 0
    %s9 = scalar_lea.sflag [#allocation3], 1
    %10 = vsyncpa %s9, 0
    %11 = vsyncpa [#allocation4], 0
    loop: start=0, step=1, limit=6
    $region2: #{tpu_custom_call.1} parent=1 // loop_pre_header
      _
    $region3: #{tpu_custom_call.1} parent=1 // loop_header
      %s13 = sphi 0, %s17
      %p14 = scmp.ge.s32.totalorder %s13, 6
      %s20 = sphi 0, %s32
      %s21 = sphi 0, %s28
      %s22 = sphi 0, %s20
      %s23 = sphi 0, %s21
      %s24 = sphi 0, %s22
      %s25 = sphi 0, %s23
      %s33 = sphi 0, %s33
      %s35 = sphi 0, %s33
      %s36 = sphi 0, %s35
      %s50 = sphi 0, %s36
      %s60 = sphi 0, %s62
      %s63 = sphi 0, %s60
      %s64 = sphi 0, %s63
      %s80 = sphi 0, %s64
      %s86 = sphi 0, %s88
      %s89 = sphi 0, %s86
      %s90 = sphi 0, %s89
      %s106 = sphi 0, %s90
    $region4: #{tpu_custom_call.1} parent=1 // loop_header_branch
      %16 = sbr.rel (%p14) target = $region8
    $region5: #{tpu_custom_call.1} parent=1 // loop_body
      %s18 = ssub.s32 %s13, 1
      %s19 = ssub.s32 %s13, 2
      %s26 = sadd.s32 1, %s21
      %p27 = scmp.ge.s32.totalorder %s26, 4
      %s28 = scalar_select %p27, 0, %s26
      %s29 = sadd.s32 1, %s20
      %s30 = scalar_select %p27, %s29, %s20
      %p31 = scmp.ge.s32.totalorder %s30, 1
      %s32 = scalar_select %p31, 0, %s30
      %s34 = sadd.s32 %s33, 1
      %p37 = scmp.eq.s32.totalorder %s13, 3
      %p38 = scmp.ne.s32.totalorder %s33, %s35
      %p39 = scmp.eq.s32.totalorder %s13, 0
      %p40 = por %p38, %p39
      %p41 = scmp.ne.s32.totalorder %s33, %s35
      %p42 = scmp.eq.s32.totalorder %s18, 3
      %p43 = por %p41, %p42
      %p44 = scmp.ne.s32.totalorder %s35, %s36
      %p45 = scmp.eq.s32.totalorder %s18, 0
      %p46 = por %p44, %p45
      %p47 = scmp.ne.s32.totalorder %s35, %s36
      %p48 = scmp.eq.s32.totalorder %s19, 3
      %p49 = por %p47, %p48
      %p51 = scmp.ne.s32.totalorder %s36, %s50
      %p52 = scmp.eq.s32.totalorder %s19, 0
      %p53 = por %p51, %p52
      %s54 = smul.u32 %s20, 4
      %s55 = sadd.s32 %s54, %s21
      %s56 = smul.u32 %s32, 4
      %s57 = sadd.s32 %s56, %s28
      %s58 = ssub.s32 %s55, %s57
      %p59 = scmp.eq.s32.totalorder %s58, 0
      %s61 = sadd.s32 %s60, 1
      %s62 = scalar_select %p59, %s60, %s61
      %p65 = pneg %p59
      %p66 = scmp.eq.s32.totalorder %s13, 3
      %p67 = por %p65, %p66
      %p68 = scmp.ne.s32.totalorder %s60, %s63
      %p69 = scmp.eq.s32.totalorder %s13, 0
      %p70 = por %p68, %p69
      %p71 = scmp.ne.s32.totalorder %s60, %s63
      %p72 = scmp.eq.s32.totalorder %s18, 3
      %p73 = por %p71, %p72
      %p74 = scmp.ne.s32.totalorder %s63, %s64
      %p75 = scmp.eq.s32.totalorder %s18, 0
      %p76 = por %p74, %p75
      %p77 = scmp.ne.s32.totalorder %s63, %s64
      %p78 = scmp.eq.s32.totalorder %s19, 3
      %p79 = por %p77, %p78
      %p81 = scmp.ne.s32.totalorder %s64, %s80
      %p82 = scmp.eq.s32.totalorder %s19, 0
      %p83 = por %p81, %p82
      %s84 = ssub.s32 %s20, %s32
      %p85 = scmp.eq.s32.totalorder %s84, 0
      %s87 = sadd.s32 %s86, 1
      %s88 = scalar_select %p85, %s86, %s87
      %p91 = pneg %p85
      %p92 = scmp.eq.s32.totalorder %s13, 3
      %p93 = por %p91, %p92
      %p94 = scmp.ne.s32.totalorder %s86, %s89
      %p95 = scmp.eq.s32.totalorder %s13, 0
      %p96 = por %p94, %p95
      %p97 = scmp.ne.s32.totalorder %s86, %s89
      %p98 = scmp.eq.s32.totalorder %s18, 3
      %p99 = por %p97, %p98
      %p100 = scmp.ne.s32.totalorder %s89, %s90
      %p101 = scmp.eq.s32.totalorder %s18, 0
      %p102 = por %p100, %p101
      %p103 = scmp.ne.s32.totalorder %s89, %s90
      %p104 = scmp.eq.s32.totalorder %s19, 3
      %p105 = por %p103, %p104
      %p107 = scmp.ne.s32.totalorder %s90, %s106
      %p108 = scmp.eq.s32.totalorder %s19, 0
      %p109 = por %p107, %p108
      %p110 = scmp.le.s32.totalorder 1, %s13
      %p111 = scmp.lt.s32.totalorder %s13, 5
      %p112 = pnand %p110, %p111
      %p113 = pneg %p112
      // Predicated region
      $region9: #{tpu_custom_call.1} parent=5 // pred_check
        _
      $region10: #{tpu_custom_call.1} parent=5 // pred_check_branch
        %115 = sbr.rel (%p112) target = $region12
      $region11: #{tpu_custom_call.1} parent=5 // pred_region
        %s116 = ssub.s32 %s13, 1
        // Predicated region
        $region13: #{tpu_custom_call.1} parent=11 // pred_check
          %p117 = pneg %p46
        $region14: #{tpu_custom_call.1} parent=11 // pred_check_branch
          %119 = sbr.rel (%p117) target = $region16
        $region15: #{tpu_custom_call.1} parent=11 // pred_region
          %121 = vsyncadd [#allocation5], 0
          %s123 = sshll.u32 %s0, 4
          %s124 = int_to_ptr.hbm [resolvable:$true] %s123
          %126 = dma.hbm_to_smem %s124, 16, [#allocation2], [#allocation5]
        $region16: #{tpu_custom_call.1} parent=11 // pred_fallthru
          _
      $region12: #{tpu_custom_call.1} parent=5 // pred_fallthru
        _
      %p127 = scmp.lt.s32.totalorder %s13, 4
      // Predicated region
      $region17: #{tpu_custom_call.1} parent=5 // pred_check
        %p128 = pneg %p127
      $region18: #{tpu_custom_call.1} parent=5 // pred_check_branch
        %130 = sbr.rel (%p128) target = $region20
      $region19: #{tpu_custom_call.1} parent=5 // pred_region
        // Predicated region
        $region21: #{tpu_custom_call.1} parent=19 // pred_check
          %p131 = pneg %p70
        $region22: #{tpu_custom_call.1} parent=19 // pred_check_branch
          %133 = sbr.rel (%p131) target = $region24
        $region23: #{tpu_custom_call.1} parent=19 // pred_region
          %s134 = sand.u32 %s60, 1
          %s135 = scalar_lea.sflag [#allocation3], %s134
          %s136 = sand.u32 %s60, 1
          %s137 = smul.addr %s136, 8
          %s138 = scalar_lea.vmem [#allocation6], %s137
          %s139 = smul.u32 %s20, 4
          %s140 = sadd.s32 %s139, %s21
          %142 = vsyncadd %s135, 0
          %s143 = smul.addr %s140, 8
          %s144 = scalar_lea.hbm %s1, %s143
          %s146 = sshll.u32 %s144, 4
          %s147 = int_to_ptr.hbm [resolvable:$true] %s146
          %s148 = sshll.u32 %s138, 4
          %s149 = int_to_ptr.vmem [resolvable:$true] %s148
          %151 = dma.hbm_to_vmem [thread:$0]  %s147, 128, %s149, %s135
        $region24: #{tpu_custom_call.1} parent=19 // pred_fallthru
          _
      $region20: #{tpu_custom_call.1} parent=5 // pred_fallthru
        _
      %p152 = scmp.le.s32.totalorder 1, %s13
      %p153 = scmp.lt.s32.totalorder %s13, 5
      %p154 = pnand %p152, %p153
      %p155 = pneg %p154
      // Predicated region
      $region25: #{tpu_custom_call.1} parent=5 // pred_check
        _
      $region26: #{tpu_custom_call.1} parent=5 // pred_check_branch
        %157 = sbr.rel (%p154) target = $region28
      $region27: #{tpu_custom_call.1} parent=5 // pred_region
        %s158 = ssub.s32 %s13, 1
        // Predicated region
        $region29: #{tpu_custom_call.1} parent=27 // pred_check
          %p159 = pneg %p46
        $region30: #{tpu_custom_call.1} parent=27 // pred_check_branch
          %161 = sbr.rel (%p159) target = $region32
        $region31: #{tpu_custom_call.1} parent=27 // pred_region
          %163 = dma.done [#allocation5], 16
        $region32: #{tpu_custom_call.1} parent=27 // pred_fallthru
          _
        %s164 = sand.u32 %s63, 1
        %s165 = scalar_lea.sflag [#allocation3], %s164
        %s166 = sand.u32 %s63, 1
        %s167 = smul.addr %s166, 8
        %s168 = scalar_lea.vmem [#allocation6], %s167
        // Predicated region
        $region33: #{tpu_custom_call.1} parent=27 // pred_check
          %p169 = pneg %p76
        $region34: #{tpu_custom_call.1} parent=27 // pred_check_branch
          %171 = sbr.rel (%p169) target = $region36
        $region35: #{tpu_custom_call.1} parent=27 // pred_region
          %173 = dma.done %s165, 128
        $region36: #{tpu_custom_call.1} parent=27 // pred_fallthru
          _
        %174 = sfence
        %p175 = pneg %p46
        %p176 = pneg %p43
        %s177 = sand.u32 %s63, 1
        %s178 = scalar_lea.sflag [#allocation3], %s177
        %s179 = sand.u32 %s63, 1
        %s180 = smul.addr %s179, 8
        %s181 = scalar_lea.vmem [#allocation6], %s180
        %p182 = pneg %p76
        %p183 = pneg %p73
        %p184 = pneg %p102
        %p185 = pneg %p99
        %s186 = smul.u32 %s22, 4
        %s187 = sadd.s32 %s186, %s23
        %p188 = scmp.eq.s32.totalorder %s23, 0
        // Predicated region
        $region37: #{tpu_custom_call.1} parent=27 // pred_check
          %p189 = pneg %p188
        $region38: #{tpu_custom_call.1} parent=27 // pred_check_branch
          %191 = sbr.rel (%p189) target = $region40
        $region39: #{tpu_custom_call.1} parent=27 // pred_region
          %192 = vst [vmem:[#allocation7] sm:$0xff] 0.0
        $region40: #{tpu_custom_call.1} parent=27 // pred_fallthru
          _
        %v193 = vld [vmem:[%s168] sm:$0xff]
        %vm194 = vcmp.gt.f32.partialorder %v193, 0.0
        %v195 = vsel %vm194, %v193, 0.0
        %v196 = vadd.f32 %v195, 0.0
        %s197 = smul.u32 %s22, 4
        %s198 = sadd.s32 %s197, %s23
        %s199 = sld [smem:[#allocation2 + %s198]]
        %v200 = vld [vmem:[#allocation7] sm:$0xff]
        %v201 = vstv %s199
        %v202 = vmul.f32 %v201, %v196
        %v203 = vadd.f32 %v200, %v202
        %204 = vst [vmem:[#allocation7] sm:$0xff] %v203
        // Predicated region
        $region41: #{tpu_custom_call.1} parent=27 // pred_check
          %p205 = pneg %p99
        $region42: #{tpu_custom_call.1} parent=27 // pred_check_branch
          %207 = sbr.rel (%p205) target = $region44
        $region43: #{tpu_custom_call.1} parent=27 // pred_region
          %209 = vsyncadd [#allocation4], 0
          %s210 = smul.addr %s22, 8
          %s211 = scalar_lea.hbm %s2, %s210
          %s213 = sshll.u32 [#allocation7], 4
          %s214 = int_to_ptr.vmem [resolvable:$true] %s213
          %s215 = sshll.u32 %s211, 4
          %s216 = int_to_ptr.hbm [resolvable:$true] %s215
          %218 = dma.vmem_to_hbm [thread:$0]  %s214, 128, %s216, [#allocation4]
        $region44: #{tpu_custom_call.1} parent=27 // pred_fallthru
          _
        // Predicated region
        $region45: #{tpu_custom_call.1} parent=27 // pred_check
          %p219 = pneg %p99
        $region46: #{tpu_custom_call.1} parent=27 // pred_check_branch
          %221 = sbr.rel (%p219) target = $region48
        $region47: #{tpu_custom_call.1} parent=27 // pred_region
          %223 = dma.done [#allocation4], 128
        $region48: #{tpu_custom_call.1} parent=27 // pred_fallthru
          _
      $region28: #{tpu_custom_call.1} parent=5 // pred_fallthru
        _
      %p224 = scmp.le.s32.totalorder 2, %s13
      // Predicated region
      $region49: #{tpu_custom_call.1} parent=5 // pred_check
        %p225 = pneg %p224
      $region50: #{tpu_custom_call.1} parent=5 // pred_check_branch
        %227 = sbr.rel (%p225) target = $region52
      $region51: #{tpu_custom_call.1} parent=5 // pred_region
        %s228 = ssub.s32 %s13, 2
      $region52: #{tpu_custom_call.1} parent=5 // pred_fallthru
        _
    $region6: #{tpu_custom_call.1} parent=1 // loop_footer
      %s17 = sadd.s32 1, %s13
    $region7: #{tpu_custom_call.1} parent=1 // loop_footer_branch
      %12 = sbr.rel target = $region3
    $region8: #{tpu_custom_call.1} parent=1 // loop_exit
      _
    %229 = vsyncpa [#allocation3], 1
    %s230 = scalar_lea.sflag [#allocation3], 1
    %231 = vsyncpa %s230, 1
    %232 = vsyncpa [#allocation4], 1
    %s233 = scalar_lea.sflag [#allocation4], 1
    %234 = vsyncpa %s233, 1
    %235 = vsyncpa [#allocation5], 1
    %s236 = scalar_lea.sflag [#allocation5], 1
    %237 = vsyncpa %s236, 1

</llo_original>
